<compile_context>
chip_gen: v7x
topology: tpu7x:2x2x1
jax: 0.10.0
libtpu: 0.0.40
codegen_flags: <defaults>
</compile_context>

<pallas_src>
import jax
import jax.numpy as jnp
from jax.experimental import pallas as pl
from jax.experimental.pallas import tpu as pltpu


# --------------------------------------------------------------------------
# Kernel: one fused multiply-add per element (pure mem-bound form).
# --------------------------------------------------------------------------
def _frozen_bn_kernel(x_ref, sb_ref, o_ref):
    # x_ref : (c_blk, t_blk)        activation tile
    # sb_ref: (c_blk, 2)  fp32      column 0 = scale, column 1 = bias (pre-folded)
    # o_ref : (c_blk, t_blk)
    scale = sb_ref[:, 0:1]
    shift = sb_ref[:, 1:2]
    o_ref[...] = (x_ref[...].astype(jnp.float32) * scale + shift).astype(o_ref.dtype)


# --------------------------------------------------------------------------
# Tile selection (robust to arbitrary extents; trailing blocks are masked).
# --------------------------------------------------------------------------
def _round_down(x, m):
    return (x // m) * m


def _default_target_block_bytes():
    # v7x (~3.2 TB/s HBM, 64 MiB VMEM): larger blocks amortize the ~0.35 us
    # per-grid-step overhead. v5e/v6e (128 MiB VMEM, slower HBM): 2 MiB blocks
    # already sit >85% of the HBM roofline.
    try:
        info = pltpu.get_tpu_info()
        if getattr(info, "vmem_capacity_bytes", 128 << 20) <= (64 << 20):
            return 4 << 20
    except Exception:
        pass
    return 2 << 20


def _pick_tiles(C, HW, itemsize, target_bytes):
    """Lane-dense, dtype-aware tiles; partial trailing blocks handled by cdiv grid."""
    lane = 128
    sub = max(8, 32 // itemsize)  # native sublane pack: 8 f32, 16 bf16, 32 int8

    # Spatial (lane) tile.
    if HW < lane:
        t_blk = HW                                   # full-extent trailing dim: always legal
    else:
        t_blk = min(2048, _round_down(HW, lane))     # lane-dense, masked trailing block

    # Channel (sublane) tile, sized toward target_bytes.
    if C < sub:
        c_blk = C                                    # full-extent second-to-last dim
    else:
        want_c = max(sub, target_bytes // (t_blk * itemsize))
        c_blk = max(sub, _round_down(min(C, want_c), sub))

    # If the channel extent limited the block, grow the spatial tile instead.
    if HW >= lane and c_blk * t_blk * itemsize < target_bytes:
        want_t = _round_down(target_bytes // (c_blk * itemsize), lane)
        t_blk = max(t_blk, min(_round_down(HW, lane), want_t))

    return c_blk, t_blk


# --------------------------------------------------------------------------
# Wrapper: fold frozen stats once (fp32), launch the mem-bound kernel.
# --------------------------------------------------------------------------
def frozen_batch_norm_2d(x, weight, bias, running_mean, running_var, eps=1e-5,
                         target_block_bytes=None):
    """x: (N, C, H, W); weight/bias/running_mean/running_var: (C,)."""
    N, C, H, W = x.shape
    HW = H * W

    # ---- fold frozen parameters once, in fp32 (matches PyTorch fp32 buffers) ----
    w32 = weight.astype(jnp.float32)
    b32 = bias.astype(jnp.float32)
    rm32 = running_mean.astype(jnp.float32)
    rv32 = running_var.astype(jnp.float32)
    scale = w32 * jax.lax.rsqrt(rv32 + jnp.float32(eps))
    shift = b32 - rm32 * scale
    sb = jnp.stack([scale, shift], axis=1)           # (C, 2) fp32: one DMA per c-block

    # ---- lane-dense layout (free, contiguous reshape) & tile sizing ----
    x3 = x.reshape(N, C, HW)
    itemsize = jnp.dtype(x.dtype).itemsize
    if target_block_bytes is None:
        target_block_bytes = _default_target_block_bytes()
    c_blk, t_blk = _pick_tiles(C, HW, itemsize, target_block_bytes)

    grid = (N, pl.cdiv(C, c_blk), pl.cdiv(HW, t_blk))

    x_spec = pl.BlockSpec((None, c_blk, t_blk), lambda n, c, t: (n, c, t))
    p_spec = pl.BlockSpec((c_blk, 2), lambda n, c, t: (c, 0))

    out3 = pl.pallas_call(
        _frozen_bn_kernel,
        out_shape=jax.ShapeDtypeStruct((N, C, HW), x.dtype),
        grid_spec=pltpu.PrefetchScalarGridSpec(
            num_scalar_prefetch=0,
            grid=grid,
            in_specs=[x_spec, p_spec],
            out_specs=x_spec,
        ),
        compiler_params=pltpu.CompilerParams(
            dimension_semantics=("parallel", "parallel", "parallel"),
            vmem_limit_bytes=32 * 1024 * 1024,
        ),
    )(x3, sb)

    return out3.reshape(N, C, H, W)


# --------------------------------------------------------------------------
# Pure-JAX reference (mirrors the PyTorch forward exactly).
# --------------------------------------------------------------------------
def _reference(x, weight, bias, running_mean, running_var, eps=1e-5):
    C = x.shape[1]
    scale = (weight * jax.lax.rsqrt(running_var + eps)).reshape(1, C, 1, 1)
    shift = bias.reshape(1, C, 1, 1) - running_mean.reshape(1, C, 1, 1) * scale
    return x * scale + shift


if __name__ == "__main__":
    eps = 1e-5

    # ---- primary check: small shape consistent with the module ----
    N, C, H, W = 2, 4, 16, 16
    kx, kw, kb, km, kv = jax.random.split(jax.random.PRNGKey(0), 5)
    x = jax.random.normal(kx, (N, C, H, W), dtype=jnp.float32)
    weight = jnp.ones((C,), jnp.float32) + 0.1 * jax.random.normal(kw, (C,))
    bias = 0.1 * jax.random.normal(kb, (C,))
    running_mean = 0.1 * jax.random.normal(km, (C,))
    running_var = jnp.ones((C,), jnp.float32) + 0.1 * jax.random.uniform(kv, (C,))

    out = jax.block_until_ready(
        frozen_batch_norm_2d(x, weight, bias, running_mean, running_var, eps))
    ref = _reference(x, weight, bias, running_mean, running_var, eps)
    assert out.shape == x.shape and out.dtype == x.dtype
    assert jnp.allclose(out, ref, atol=1e-5, rtol=1e-5)

    # ---- awkward extents: exercises cdiv grid + masked trailing blocks ----
    N2, C2, H2, W2 = 1, 13, 14, 14
    k1, k2 = jax.random.split(jax.random.PRNGKey(1))
    x2 = jax.random.normal(k1, (N2, C2, H2, W2), dtype=jnp.float32)
    w2 = jnp.ones((C2,), jnp.float32)
    b2 = 0.05 * jax.random.normal(k2, (C2,))
    rm2 = jnp.full((C2,), 0.2, jnp.float32)
    rv2 = jnp.full((C2,), 1.5, jnp.float32)
    out2 = jax.block_until_ready(frozen_batch_norm_2d(x2, w2, b2, rm2, rv2, eps))
    ref2 = _reference(x2, w2, b2, rm2, rv2, eps)
    assert jnp.allclose(out2, ref2, atol=1e-5, rtol=1e-5)

    # ---- bf16 activations: exercises dtype-aware sublane tiling ----
    N3, C3, H3, W3 = 1, 48, 10, 13
    xb = jax.random.normal(jax.random.PRNGKey(2), (N3, C3, H3, W3), dtype=jnp.bfloat16)
    w3 = jnp.full((C3,), 0.9, jnp.float32)
    b3 = jnp.full((C3,), 0.1, jnp.float32)
    rm3 = jnp.full((C3,), -0.05, jnp.float32)
    rv3 = jnp.full((C3,), 2.0, jnp.float32)
    out3 = jax.block_until_ready(frozen_batch_norm_2d(xb, w3, b3, rm3, rv3, eps))
    ref3 = _reference(xb.astype(jnp.float32), w3, b3, rm3, rv3, eps).astype(jnp.bfloat16)
    assert out3.dtype == jnp.bfloat16
    assert jnp.allclose(out3.astype(jnp.float32), ref3.astype(jnp.float32),
                        atol=2e-2, rtol=2e-2)

    print("KERNEL_OK")
</pallas_src>

<mosaic_0001>
module attributes {stable_mosaic.version = 11 : i64} {
  func.func @_frozen_bn_kernel(%arg0: i32, %arg1: i32, %arg2: i32, %arg3: memref<1x4x256xf32, #tpu.memory_space<vmem>>, %arg4: memref<4x2xf32, #tpu.memory_space<vmem>>, %arg5: memref<1x4x256xf32, #tpu.memory_space<vmem>>) attributes {dimension_semantics = [#tpu.dimension_semantics<parallel>, #tpu.dimension_semantics<parallel>, #tpu.dimension_semantics<parallel>], iteration_bounds = array<i64: 2, 1, 1>, scalar_prefetch = 0 : i64, scratch_operands = 0 : i64, tpu.core_type = #tpu.core_type<tc>, window_params = [{transform_indices = @transform_0, window_bounds = array<i64: 1, 4, 256>}, {transform_indices = @transform_1, window_bounds = array<i64: 4, 2>}, {transform_indices = @transform_2, window_bounds = array<i64: 1, 4, 256>}]} {
    %c0 = arith.constant 0 : index
    %c0_0 = arith.constant 0 : index
    %0 = vector.load %arg4[%c0, %c0_0] : memref<4x2xf32, #tpu.memory_space<vmem>>, vector<4x1xf32>
    %c0_1 = arith.constant 0 : index
    %c1 = arith.constant 1 : index
    %1 = vector.load %arg4[%c0_1, %c1] : memref<4x2xf32, #tpu.memory_space<vmem>>, vector<4x1xf32>
    %c0_2 = arith.constant 0 : index
    %c0_3 = arith.constant 0 : index
    %c0_4 = arith.constant 0 : index
    %2 = vector.load %arg3[%c0_2, %c0_3, %c0_4] : memref<1x4x256xf32, #tpu.memory_space<vmem>>, vector<1x4x256xf32>
    %3 = vector.shape_cast %2 : vector<1x4x256xf32> to vector<4x256xf32>
    %4 = vector.broadcast %0 : vector<4x1xf32> to vector<4x256xf32>
    %5 = arith.mulf %3, %4 : vector<4x256xf32>
    %6 = vector.broadcast %1 : vector<4x1xf32> to vector<4x256xf32>
    %7 = arith.addf %5, %6 : vector<4x256xf32>
    %c0_5 = arith.constant 0 : index
    %c0_6 = arith.constant 0 : index
    %c0_7 = arith.constant 0 : index
    %8 = vector.load %arg5[%c0_5, %c0_6, %c0_7] : memref<1x4x256xf32, #tpu.memory_space<vmem>>, vector<1x4x256xf32>
    %9 = vector.shape_cast %8 : vector<1x4x256xf32> to vector<4x256xf32>
    %10 = vector.shape_cast %7 : vector<4x256xf32> to vector<1x4x256xf32>
    tpu.vector_store %arg5[%c0_5, %c0_6, %c0_7], %10 {strides = array<i32>} : memref<1x4x256xf32, #tpu.memory_space<vmem>>, vector<1x4x256xf32>,
    return
  }
  func.func @transform_0(%arg0: i32, %arg1: i32, %arg2: i32) -> (i32, i32, i32) {
    %c0_i32 = arith.constant 0 : i32
    return %arg0, %arg1, %arg2 : i32, i32, i32
  }
  func.func @transform_1(%arg0: i32, %arg1: i32, %arg2: i32) -> (i32, i32) {
    %c0_i32 = arith.constant 0 : i32
    %c0_i32_0 = arith.constant 0 : i32
    return %arg1, %c0_i32 : i32, i32
  }
  func.func @transform_2(%arg0: i32, %arg1: i32, %arg2: i32) -> (i32, i32, i32) {
    %c0_i32 = arith.constant 0 : i32
    return %arg0, %arg1, %arg2 : i32, i32, i32
  }
}

</mosaic_0001>

<llo_original>
// kernel: tpu_custom_call.1
$region0: #{tpu_custom_call.1}
  #allocation0 [shape = 'u32[]', space=smem, size = 0x4, offset = 0x4, fixed_abs, tag = 'smem constant byte address 0x4 - core index']
  #allocation1 [shape = 'u32[144,128]{1,0:T(1,128)}', space=vmem, size = 0x12000, scoped, tag = 'internal scratch']
  %s0 = inlined_call_operand.hbm [shape: f32[2,4,256], index: 0, kind: input, shape index: {}]
  %s1 = inlined_call_operand.vmem [shape: f32[4,2], index: 1, kind: input, shape index: {}]
  %s2 = inlined_call_operand.hbm [shape: f32[2,4,256], index: 2, kind: output, shape index: {}]
  %s3 = sld [smem:[#allocation0]]
  $region45: #{tpu_custom_call.1} parent=0
    _
  %s5 = ssub.s32 1, %s3
  %s6 = scalar_select 0, %s5, %s3
  $region1: #{tpu_custom_call.1} parent=0
    #allocation2 [shape = 'u8[8192]{0}', space=vmem, size = 0x2000, scoped, tag = 'input window, operand 0']
    #allocation3 [shape = 's32[2]{0}', space=sflag, size = 0x8, scoped, tag = 'scoped memory for tpu_custom_call.1']
    #allocation4 [shape = 's32[2]{0}', space=sflag, size = 0x8, scoped, tag = 'scoped memory for tpu_custom_call.1']
    #allocation5 [shape = 'u8[8192]{0}', space=vmem, size = 0x2000, scoped, tag = 'output window, operand 0']
    %7 = vsyncpa [#allocation3], 0
    %s8 = scalar_lea.sflag [#allocation3], 1
    %9 = vsyncpa %s8, 0
    %10 = vsyncpa [#allocation4], 0
    %s11 = scalar_lea.sflag [#allocation4], 1
    %12 = vsyncpa %s11, 0
    loop: start=0, step=1, limit=4
    $region2: #{tpu_custom_call.1} parent=1 // loop_pre_header
      _
    $region3: #{tpu_custom_call.1} parent=1 // loop_header
      %s14 = sphi 0, %s18
      %p15 = scmp.ge.s32.totalorder %s14, 4
      %s21 = sphi 0, %s40
      %s22 = sphi 0, %s36
      %s23 = sphi 0, %s32
      %s24 = sphi 0, %s21
      %s25 = sphi 0, %s22
      %s26 = sphi 0, %s23
      %s27 = sphi 0, %s24
      %s28 = sphi 0, %s25
      %s29 = sphi 0, %s26
      %s47 = sphi 0, %s49
      %s50 = sphi 0, %s47
      %s51 = sphi 0, %s50
      %s67 = sphi 0, %s51
      %s73 = sphi 0, %s75
      %s76 = sphi 0, %s73
      %s77 = sphi 0, %s76
      %s93 = sphi 0, %s77
      %s103 = sphi 0, %s105
      %s106 = sphi 0, %s103
      %s107 = sphi 0, %s106
      %s123 = sphi 0, %s107
    $region4: #{tpu_custom_call.1} parent=1 // loop_header_branch
      %17 = sbr.rel (%p15) target = $region8
    $region5: #{tpu_custom_call.1} parent=1 // loop_body
      %s19 = ssub.s32 %s14, 1
      %s20 = ssub.s32 %s14, 2
      %s30 = sadd.s32 1, %s23
      %p31 = scmp.ge.s32.totalorder %s30, 1
      %s32 = scalar_select %p31, 0, %s30
      %s33 = sadd.s32 1, %s22
      %s34 = scalar_select %p31, %s33, %s22
      %p35 = scmp.ge.s32.totalorder %s34, 1
      %s36 = scalar_select %p35, 0, %s34
      %s37 = sadd.s32 1, %s21
      %s38 = scalar_select %p35, %s37, %s21
      %p39 = scmp.ge.s32.totalorder %s38, 2
      %s40 = scalar_select %p39, 0, %s38
      %s41 = ssub.s32 %s21, %s40
      %s42 = ssub.s32 %s22, %s36
      %s43 = sor.u32 %s41, %s42
      %s44 = ssub.s32 %s23, %s32
      %s45 = sor.u32 %s43, %s44
      %p46 = scmp.eq.s32.totalorder %s45, 0
      %s48 = sadd.s32 %s47, 1
      %s49 = scalar_select %p46, %s47, %s48
      %p52 = pneg %p46
      %p53 = scmp.eq.s32.totalorder %s14, 1
      %p54 = por %p52, %p53
      %p55 = scmp.ne.s32.totalorder %s47, %s50
      %p56 = scmp.eq.s32.totalorder %s14, 0
      %p57 = por %p55, %p56
      %p58 = scmp.ne.s32.totalorder %s47, %s50
      %p59 = scmp.eq.s32.totalorder %s19, 1
      %p60 = por %p58, %p59
      %p61 = scmp.ne.s32.totalorder %s50, %s51
      %p62 = scmp.eq.s32.totalorder %s19, 0
      %p63 = por %p61, %p62
      %p64 = scmp.ne.s32.totalorder %s50, %s51
      %p65 = scmp.eq.s32.totalorder %s20, 1
      %p66 = por %p64, %p65
      %p68 = scmp.ne.s32.totalorder %s51, %s67
      %p69 = scmp.eq.s32.totalorder %s20, 0
      %p70 = por %p68, %p69
      %s71 = ssub.s32 %s22, %s36
      %p72 = scmp.eq.s32.totalorder %s71, 0
      %s74 = sadd.s32 %s73, 1
      %s75 = scalar_select %p72, %s73, %s74
      %p78 = pneg %p72
      %p79 = scmp.eq.s32.totalorder %s14, 1
      %p80 = por %p78, %p79
      %p81 = scmp.ne.s32.totalorder %s73, %s76
      %p82 = scmp.eq.s32.totalorder %s14, 0
      %p83 = por %p81, %p82
      %p84 = scmp.ne.s32.totalorder %s73, %s76
      %p85 = scmp.eq.s32.totalorder %s19, 1
      %p86 = por %p84, %p85
      %p87 = scmp.ne.s32.totalorder %s76, %s77
      %p88 = scmp.eq.s32.totalorder %s19, 0
      %p89 = por %p87, %p88
      %p90 = scmp.ne.s32.totalorder %s76, %s77
      %p91 = scmp.eq.s32.totalorder %s20, 1
      %p92 = por %p90, %p91
      %p94 = scmp.ne.s32.totalorder %s77, %s93
      %p95 = scmp.eq.s32.totalorder %s20, 0
      %p96 = por %p94, %p95
      %s97 = ssub.s32 %s21, %s40
      %s98 = ssub.s32 %s22, %s36
      %s99 = sor.u32 %s97, %s98
      %s100 = ssub.s32 %s23, %s32
      %s101 = sor.u32 %s99, %s100
      %p102 = scmp.eq.s32.totalorder %s101, 0
      %s104 = sadd.s32 %s103, 1
      %s105 = scalar_select %p102, %s103, %s104
      %p108 = pneg %p102
      %p109 = scmp.eq.s32.totalorder %s14, 1
      %p110 = por %p108, %p109
      %p111 = scmp.ne.s32.totalorder %s103, %s106
      %p112 = scmp.eq.s32.totalorder %s14, 0
      %p113 = por %p111, %p112
      %p114 = scmp.ne.s32.totalorder %s103, %s106
      %p115 = scmp.eq.s32.totalorder %s19, 1
      %p116 = por %p114, %p115
      %p117 = scmp.ne.s32.totalorder %s106, %s107
      %p118 = scmp.eq.s32.totalorder %s19, 0
      %p119 = por %p117, %p118
      %p120 = scmp.ne.s32.totalorder %s106, %s107
      %p121 = scmp.eq.s32.totalorder %s20, 1
      %p122 = por %p120, %p121
      %p124 = scmp.ne.s32.totalorder %s107, %s123
      %p125 = scmp.eq.s32.totalorder %s20, 0
      %p126 = por %p124, %p125
      %p127 = scmp.le.s32.totalorder 1, %s14
      %p128 = scmp.lt.s32.totalorder %s14, 3
      %p129 = pnand %p127, %p128
      %p130 = pneg %p129
      // Predicated region
      $region9: #{tpu_custom_call.1} parent=5 // pred_check
        _
      $region10: #{tpu_custom_call.1} parent=5 // pred_check_branch
        %132 = sbr.rel (%p129) target = $region12
      $region11: #{tpu_custom_call.1} parent=5 // pred_region
        %s133 = ssub.s32 %s14, 1
        // Predicated region
        $region13: #{tpu_custom_call.1} parent=11 // pred_check
          %p134 = pneg %p89
        $region14: #{tpu_custom_call.1} parent=11 // pred_check_branch
          %136 = sbr.rel (%p134) target = $region16
        $region15: #{tpu_custom_call.1} parent=11 // pred_region
          %p137 = scmp.lt.s32.totalorder %s25, 0
          %s138 = scalar_select %p137, %s25, 0
          %s139 = smul.addr %s138, 4
          %s140 = scalar_lea.vmem %s1, %s139
        $region16: #{tpu_custom_call.1} parent=11 // pred_fallthru
          _
      $region12: #{tpu_custom_call.1} parent=5 // pred_fallthru
        _
      %p141 = scmp.lt.s32.totalorder %s14, 2
      // Predicated region
      $region17: #{tpu_custom_call.1} parent=5 // pred_check
        %p142 = pneg %p141
      $region18: #{tpu_custom_call.1} parent=5 // pred_check_branch
        %144 = sbr.rel (%p142) target = $region20
      $region19: #{tpu_custom_call.1} parent=5 // pred_region
        // Predicated region
        $region21: #{tpu_custom_call.1} parent=19 // pred_check
          %p145 = pneg %p57
        $region22: #{tpu_custom_call.1} parent=19 // pred_check_branch
          %147 = sbr.rel (%p145) target = $region24
        $region23: #{tpu_custom_call.1} parent=19 // pred_region
          %s148 = sand.u32 %s47, 1
          %s149 = scalar_lea.sflag [#allocation3], %s148
          %s150 = sand.u32 %s47, 1
          %s151 = smul.addr %s150, 8
          %s152 = scalar_lea.vmem [#allocation2], %s151
          %s153 = smul.u32 2, %s23
          %s155 = ssub.s32 128, 128
          %156 = vsyncadd %s149, %s155
          %s157 = smul.addr %s22, 2
          %s158 = sadd.s32 %s153, %s157
          %s159 = smul.addr %s21, 2
          %s160 = sadd.s32 %s158, %s159
          %s161 = smul.addr %s160, 64
          %s162 = scalar_lea.hbm %s0, %s161
          %s164 = sshll.u32 %s152, 4
          %s165 = int_to_ptr.vmem [resolvable:$true] %s164
          %167 = dma.hbm_to_vmem [thread:$0]  %s162, 128, %s165, %s149
        $region24: #{tpu_custom_call.1} parent=19 // pred_fallthru
          _
      $region20: #{tpu_custom_call.1} parent=5 // pred_fallthru
        _
      %p168 = scmp.le.s32.totalorder 1, %s14
      %p169 = scmp.lt.s32.totalorder %s14, 3
      %p170 = pnand %p168, %p169
      %p171 = pneg %p170
      // Predicated region
      $region25: #{tpu_custom_call.1} parent=5 // pred_check
        _
      $region26: #{tpu_custom_call.1} parent=5 // pred_check_branch
        %173 = sbr.rel (%p170) target = $region28
      $region27: #{tpu_custom_call.1} parent=5 // pred_region
        %s174 = ssub.s32 %s14, 1
        %s175 = sand.u32 %s50, 1
        %s176 = scalar_lea.sflag [#allocation3], %s175
        %s177 = sand.u32 %s50, 1
        %s178 = smul.addr %s177, 8
        %s179 = scalar_lea.vmem [#allocation2], %s178
        // Predicated region
        $region29: #{tpu_custom_call.1} parent=27 // pred_check
          %p180 = pneg %p63
        $region30: #{tpu_custom_call.1} parent=27 // pred_check_branch
          %182 = sbr.rel (%p180) target = $region32
        $region31: #{tpu_custom_call.1} parent=27 // pred_region
          %183 = dma.done %s176, 128
        $region32: #{tpu_custom_call.1} parent=27 // pred_fallthru
          _
        %s184 = sand.u32 %s50, 1
        %s185 = scalar_lea.sflag [#allocation3], %s184
        %s186 = sand.u32 %s50, 1
        %s187 = smul.addr %s186, 8
        %s188 = scalar_lea.vmem [#allocation2], %s187
        %p189 = pneg %p63
        %p190 = pneg %p60
        %p191 = scmp.lt.s32.totalorder %s25, 0
        %s192 = scalar_select %p191, %s25, 0
        %s193 = smul.addr %s192, 4
        %s194 = scalar_lea.vmem %s1, %s193
        %p195 = pneg %p89
        %p196 = pneg %p86
        %p197 = pneg %p119
        %p198 = pneg %p116
        %s199 = sand.u32 %s106, 1
        %s200 = scalar_lea.sflag [#allocation4], %s199
        %s201 = sand.u32 %s106, 1
        %s202 = smul.addr %s201, 8
        %s203 = scalar_lea.vmem [#allocation5], %s202
        %s204 = smul.u32 2, %s26
        %p205 = scmp.lt.s32.totalorder %s25, 0
        %s206 = scalar_select %p205, %s25, 0
        %s207 = smul.addr %s206, 4
        %s208 = scalar_lea.vmem %s1, %s207
        %s209 = smul.u32 2, %s26
        %v210 = vld [vmem:[%s208] sm:$0xf]
        %v211 = vld [vmem:[%s179] sm:$0xff]
        %213 = vset.pattern.permute.xlu0 0
        %214 = vperm.xlu0 %213, %v210
        %v215 = vpop.permute.xlu0 %214
        %v217 = vunpack.c.l.s4 839922192
        %v218 = vunpack.c.0.s8 %v217
        %v219 = vlaneseq
        %v220 = vshrl.u32 %v219, 7
        %v221 = vsub.s32 %v218, %v220
        %v222 = vrot.slane %v215, %v221
        %v224 = vmul.f32 %v211, %v222
        %225 = vset.pattern.permute.xlu0 1
        %226 = vperm.xlu0 %225, %v210
        %v227 = vpop.permute.xlu0 %226
        %v229 = vunpack.c.l.s4 839922192
        %v230 = vunpack.c.0.s8 %v229
        %v231 = vlaneseq
        %v232 = vshrl.u32 %v231, 7
        %v233 = vsub.s32 %v230, %v232
        %v234 = vrot.slane %v227, %v233
        %v236 = vadd.f32 %v224, %v234
        %237 = vst [vmem:[%s203] sm:$0xff] %v236
        %s238 = sand.u32 %s106, 1
        %s239 = scalar_lea.sflag [#allocation4], %s238
        %s240 = sand.u32 %s106, 1
        %s241 = smul.addr %s240, 8
        %s242 = scalar_lea.vmem [#allocation5], %s241
        // Predicated region
        $region33: #{tpu_custom_call.1} parent=27 // pred_check
          %p243 = pneg %p116
        $region34: #{tpu_custom_call.1} parent=27 // pred_check_branch
          %245 = sbr.rel (%p243) target = $region36
        $region35: #{tpu_custom_call.1} parent=27 // pred_region
          %s246 = smul.u32 2, %s26
          %s248 = ssub.s32 128, 128
          %249 = vsyncadd %s239, %s248
          %s250 = smul.addr %s25, 2
          %s251 = sadd.s32 %s246, %s250
          %s252 = smul.addr %s24, 2
          %s253 = sadd.s32 %s251, %s252
          %s254 = smul.addr %s253, 64
          %s255 = scalar_lea.hbm %s2, %s254
          %s257 = sshll.u32 %s242, 4
          %s258 = int_to_ptr.vmem [resolvable:$true] %s257
          %260 = dma.vmem_to_hbm [thread:$0]  %s258, 128, %s255, %s239
        $region36: #{tpu_custom_call.1} parent=27 // pred_fallthru
          _
      $region28: #{tpu_custom_call.1} parent=5 // pred_fallthru
        _
      %p261 = scmp.le.s32.totalorder 2, %s14
      // Predicated region
      $region37: #{tpu_custom_call.1} parent=5 // pred_check
        %p262 = pneg %p261
      $region38: #{tpu_custom_call.1} parent=5 // pred_check_branch
        %264 = sbr.rel (%p262) target = $region40
      $region39: #{tpu_custom_call.1} parent=5 // pred_region
        %s265 = ssub.s32 %s14, 2
        // Predicated region
        $region41: #{tpu_custom_call.1} parent=39 // pred_check
          %p266 = pneg %p122
        $region42: #{tpu_custom_call.1} parent=39 // pred_check_branch
          %268 = sbr.rel (%p266) target = $region44
        $region43: #{tpu_custom_call.1} parent=39 // pred_region
          %s269 = sand.u32 %s107, 1
          %s270 = scalar_lea.sflag [#allocation4], %s269
          %s271 = sand.u32 %s107, 1
          %s272 = smul.addr %s271, 8
          %s273 = scalar_lea.vmem [#allocation5], %s272
          %274 = dma.done %s270, 128
        $region44: #{tpu_custom_call.1} parent=39 // pred_fallthru
          _
      $region40: #{tpu_custom_call.1} parent=5 // pred_fallthru
        _
    $region6: #{tpu_custom_call.1} parent=1 // loop_footer
      %s18 = sadd.s32 1, %s14
    $region7: #{tpu_custom_call.1} parent=1 // loop_footer_branch
      %13 = sbr.rel target = $region3
    $region8: #{tpu_custom_call.1} parent=1 // loop_exit
      _
    %275 = vsyncpa [#allocation3], 1
    %s276 = scalar_lea.sflag [#allocation3], 1
    %277 = vsyncpa %s276, 1
    %278 = vsyncpa [#allocation4], 1
    %s279 = scalar_lea.sflag [#allocation4], 1
    %280 = vsyncpa %s279, 1

</llo_original>
